<compile_context>
chip_gen: v7x
topology: tpu7x:2x2x1
jax: 0.10.0
libtpu: 0.0.40
codegen_flags: <defaults>
</compile_context>

<pallas_src>
import jax
import jax.numpy as jnp
from jax.experimental import pallas as pl
from jax.experimental.pallas import tpu as pltpu


def _round_up(x, m):
    return ((x + m - 1) // m) * m


def _outconv_kernel(x_ref, w_ref, b_ref, o_ref):
    # x_ref : (C_in, T)     VMEM block (spatial dim in lanes)
    # w_ref : (C_out, C_in) SMEM scalars
    # b_ref : (C_out,)      SMEM scalars
    # o_ref : (C_out, T)    VMEM block (lane-dense store)
    c_out, c_in = w_ref.shape
    x = x_ref[...].astype(jnp.float32)                # (C_in, T)
    rows = []
    for co in range(c_out):                           # fully unrolled (tiny C_out)
        acc = x[0:1, :] * w_ref[co, 0]                # (1, T) f32, VPU broadcast-FMA
        for ci in range(1, c_in):
            acc = acc + x[ci:ci + 1, :] * w_ref[co, ci]
        rows.append(acc + b_ref[co])
    out = jnp.concatenate(rows, axis=0)               # (C_out, T)
    o_ref[...] = out.astype(o_ref.dtype)


def outconv_pallas(x_nchw, weight, bias, *, max_tile=4096):
    """1x1 Conv2d forward (PyTorch nn.Conv2d(in, out, kernel_size=1) semantics).

    x_nchw : (N, C_in, H, W)
    weight : (C_out, C_in, 1, 1)
    bias   : (C_out,)
    returns: (N, C_out, H, W)
    """
    N, C_in, H, W = x_nchw.shape
    C_out = weight.shape[0]
    HW = H * W

    x3 = x_nchw.reshape(N, C_in, HW)                  # free reshape, stays NCHW
    w_mat = weight.reshape(C_out, C_in)
    b_vec = bias.reshape(C_out)

    # Large lane-dense spatial tile: multiple of 128, capped at max_tile.
    # Double-buffered (in + out) blocks are ~48*T bytes -> far under any
    # generation's scoped VMEM limit (v5e 16 MiB, v6e/v7x 32 MiB defaults).
    T = min(max_tile, _round_up(HW, 128))
    grid = (N, pl.cdiv(HW, T))

    itemsize = jnp.dtype(x_nchw.dtype).itemsize
    cost = pl.CostEstimate(
        flops=2 * N * HW * C_in * C_out,
        transcendentals=0,
        bytes_accessed=N * HW * (C_in + C_out) * itemsize
        + (C_out * C_in + C_out) * 4,
    )

    out3 = pl.pallas_call(
        _outconv_kernel,
        out_shape=jax.ShapeDtypeStruct((N, C_out, HW), x_nchw.dtype),
        grid_spec=pltpu.PrefetchScalarGridSpec(
            num_scalar_prefetch=0,
            grid=grid,
            in_specs=[
                # Batch dim squeezed out; kernel sees (C_in, T).
                pl.BlockSpec((None, C_in, T), lambda n, s: (n, 0, s)),
                # Tiny weight/bias as SMEM scalars (no VMEM pipeline slot).
                pl.BlockSpec(memory_space=pltpu.MemorySpace.SMEM),
                pl.BlockSpec(memory_space=pltpu.MemorySpace.SMEM),
            ],
            out_specs=pl.BlockSpec((None, C_out, T), lambda n, s: (n, 0, s)),
        ),
        compiler_params=pltpu.CompilerParams(
            dimension_semantics=("parallel", "parallel")),
        cost_estimate=cost,
    )(x3, w_mat, b_vec)

    return out3.reshape(N, C_out, H, W)


def _reference(x_nchw, weight, bias):
    # Pure-JAX reference for the 1x1 conv (NCHW).
    w = weight.reshape(weight.shape[0], weight.shape[1])   # (C_out, C_in)
    y = jnp.einsum("nchw,oc->nohw", x_nchw, w)
    return y + bias.reshape(1, -1, 1, 1)


if __name__ == "__main__":
    key = jax.random.PRNGKey(0)
    k_x, k_w, k_b = jax.random.split(key, 3)

    N, C_in, H, W = 2, 4, 16, 16
    C_out = 2

    x = jax.random.normal(k_x, (N, C_in, H, W), dtype=jnp.float32)
    # Deterministic parameter init (shapes match nn.Conv2d(in, out, kernel_size=1)).
    weight = jax.random.normal(k_w, (C_out, C_in, 1, 1), dtype=jnp.float32) * 0.1
    bias = jax.random.normal(k_b, (C_out,), dtype=jnp.float32) * 0.1

    y = outconv_pallas(x, weight, bias)
    y = jax.block_until_ready(y)

    y_ref = _reference(x, weight, bias)
    assert y.shape == (N, C_out, H, W)
    assert jnp.allclose(y, y_ref, atol=1e-5, rtol=1e-5)

    print("KERNEL_OK")
</pallas_src>

<mosaic_0001>
module attributes {stable_mosaic.version = 11 : i64} {
  func.func @_outconv_kernel(%arg0: i32, %arg1: i32, %arg2: memref<1x4x256xf32, #tpu.memory_space<vmem>>, %arg3: memref<2x4xf32, #tpu.memory_space<smem>>, %arg4: memref<2xf32, #tpu.memory_space<smem>>, %arg5: memref<1x2x256xf32, #tpu.memory_space<vmem>>) attributes {dimension_semantics = [#tpu.dimension_semantics<parallel>, #tpu.dimension_semantics<parallel>], iteration_bounds = array<i64: 2, 1>, scalar_prefetch = 0 : i64, scratch_operands = 0 : i64, tpu.core_type = #tpu.core_type<tc>, window_params = [{transform_indices = @transform_0, window_bounds = array<i64: 1, 4, 256>}, {transform_indices = @transform_1, window_bounds = array<i64: 2, 4>}, {transform_indices = @transform_2, window_bounds = array<i64: 2>}, {transform_indices = @transform_3, window_bounds = array<i64: 1, 2, 256>}]} {
    %c0 = arith.constant 0 : index
    %c0_0 = arith.constant 0 : index
    %c0_1 = arith.constant 0 : index
    %0 = vector.load %arg2[%c0, %c0_0, %c0_1] : memref<1x4x256xf32, #tpu.memory_space<vmem>>, vector<1x4x256xf32>
    %1 = vector.shape_cast %0 : vector<1x4x256xf32> to vector<4x256xf32>
    %2 = vector.extract_strided_slice %1 {offsets = [0, 0], sizes = [1, 256], strides = [1, 1]} : vector<4x256xf32> to vector<1x256xf32>
    %c0_2 = arith.constant 0 : index
    %c0_3 = arith.constant 0 : index
    %3 = memref.load %arg3[%c0_2, %c0_3] : memref<2x4xf32, #tpu.memory_space<smem>>
    %4 = vector.broadcast %3 : f32 to vector<1x256xf32>
    %5 = arith.mulf %2, %4 : vector<1x256xf32>
    %6 = vector.extract_strided_slice %1 {offsets = [1, 0], sizes = [1, 256], strides = [1, 1]} : vector<4x256xf32> to vector<1x256xf32>
    %c0_4 = arith.constant 0 : index
    %c1 = arith.constant 1 : index
    %7 = memref.load %arg3[%c0_4, %c1] : memref<2x4xf32, #tpu.memory_space<smem>>
    %8 = vector.broadcast %7 : f32 to vector<1x256xf32>
    %9 = arith.mulf %6, %8 : vector<1x256xf32>
    %10 = arith.addf %5, %9 : vector<1x256xf32>
    %11 = vector.extract_strided_slice %1 {offsets = [2, 0], sizes = [1, 256], strides = [1, 1]} : vector<4x256xf32> to vector<1x256xf32>
    %c0_5 = arith.constant 0 : index
    %c2 = arith.constant 2 : index
    %12 = memref.load %arg3[%c0_5, %c2] : memref<2x4xf32, #tpu.memory_space<smem>>
    %13 = vector.broadcast %12 : f32 to vector<1x256xf32>
    %14 = arith.mulf %11, %13 : vector<1x256xf32>
    %15 = arith.addf %10, %14 : vector<1x256xf32>
    %16 = vector.extract_strided_slice %1 {offsets = [3, 0], sizes = [1, 256], strides = [1, 1]} : vector<4x256xf32> to vector<1x256xf32>
    %c0_6 = arith.constant 0 : index
    %c3 = arith.constant 3 : index
    %17 = memref.load %arg3[%c0_6, %c3] : memref<2x4xf32, #tpu.memory_space<smem>>
    %18 = vector.broadcast %17 : f32 to vector<1x256xf32>
    %19 = arith.mulf %16, %18 : vector<1x256xf32>
    %20 = arith.addf %15, %19 : vector<1x256xf32>
    %c0_7 = arith.constant 0 : index
    %21 = memref.load %arg4[%c0_7] : memref<2xf32, #tpu.memory_space<smem>>
    %22 = vector.broadcast %21 : f32 to vector<1x256xf32>
    %23 = arith.addf %20, %22 : vector<1x256xf32>
    %24 = vector.extract_strided_slice %1 {offsets = [0, 0], sizes = [1, 256], strides = [1, 1]} : vector<4x256xf32> to vector<1x256xf32>
    %c1_8 = arith.constant 1 : index
    %c0_9 = arith.constant 0 : index
    %25 = memref.load %arg3[%c1_8, %c0_9] : memref<2x4xf32, #tpu.memory_space<smem>>
    %26 = vector.broadcast %25 : f32 to vector<1x256xf32>
    %27 = arith.mulf %24, %26 : vector<1x256xf32>
    %28 = vector.extract_strided_slice %1 {offsets = [1, 0], sizes = [1, 256], strides = [1, 1]} : vector<4x256xf32> to vector<1x256xf32>
    %c1_10 = arith.constant 1 : index
    %c1_11 = arith.constant 1 : index
    %29 = memref.load %arg3[%c1_10, %c1_11] : memref<2x4xf32, #tpu.memory_space<smem>>
    %30 = vector.broadcast %29 : f32 to vector<1x256xf32>
    %31 = arith.mulf %28, %30 : vector<1x256xf32>
    %32 = arith.addf %27, %31 : vector<1x256xf32>
    %33 = vector.extract_strided_slice %1 {offsets = [2, 0], sizes = [1, 256], strides = [1, 1]} : vector<4x256xf32> to vector<1x256xf32>
    %c1_12 = arith.constant 1 : index
    %c2_13 = arith.constant 2 : index
    %34 = memref.load %arg3[%c1_12, %c2_13] : memref<2x4xf32, #tpu.memory_space<smem>>
    %35 = vector.broadcast %34 : f32 to vector<1x256xf32>
    %36 = arith.mulf %33, %35 : vector<1x256xf32>
    %37 = arith.addf %32, %36 : vector<1x256xf32>
    %38 = vector.extract_strided_slice %1 {offsets = [3, 0], sizes = [1, 256], strides = [1, 1]} : vector<4x256xf32> to vector<1x256xf32>
    %c1_14 = arith.constant 1 : index
    %c3_15 = arith.constant 3 : index
    %39 = memref.load %arg3[%c1_14, %c3_15] : memref<2x4xf32, #tpu.memory_space<smem>>
    %40 = vector.broadcast %39 : f32 to vector<1x256xf32>
    %41 = arith.mulf %38, %40 : vector<1x256xf32>
    %42 = arith.addf %37, %41 : vector<1x256xf32>
    %c1_16 = arith.constant 1 : index
    %43 = memref.load %arg4[%c1_16] : memref<2xf32, #tpu.memory_space<smem>>
    %44 = vector.broadcast %43 : f32 to vector<1x256xf32>
    %45 = arith.addf %42, %44 : vector<1x256xf32>
    %46 = tpu.concatenate %23, %45 in 0 : vector<1x256xf32>, vector<1x256xf32> -> vector<2x256xf32>
    %c0_17 = arith.constant 0 : index
    %c0_18 = arith.constant 0 : index
    %c0_19 = arith.constant 0 : index
    %47 = vector.load %arg5[%c0_17, %c0_18, %c0_19] : memref<1x2x256xf32, #tpu.memory_space<vmem>>, vector<1x2x256xf32>
    %48 = vector.shape_cast %47 : vector<1x2x256xf32> to vector<2x256xf32>
    %49 = vector.shape_cast %46 : vector<2x256xf32> to vector<1x2x256xf32>
    tpu.vector_store %arg5[%c0_17, %c0_18, %c0_19], %49 {strides = array<i32>} : memref<1x2x256xf32, #tpu.memory_space<vmem>>, vector<1x2x256xf32>,
    return
  }
  func.func @transform_0(%arg0: i32, %arg1: i32) -> (i32, i32, i32) {
    %c0_i32 = arith.constant 0 : i32
    %c0_i32_0 = arith.constant 0 : i32
    return %arg0, %c0_i32, %arg1 : i32, i32, i32
  }
  func.func @transform_1(%arg0: i32, %arg1: i32) -> (i32, i32) {
    %c0_i32 = arith.constant 0 : i32
    %c0_i32_0 = arith.constant 0 : i32
    %c0_i32_1 = arith.constant 0 : i32
    return %c0_i32, %c0_i32_0 : i32, i32
  }
  func.func @transform_2(%arg0: i32, %arg1: i32) -> i32 {
    %c0_i32 = arith.constant 0 : i32
    %c0_i32_0 = arith.constant 0 : i32
    return %c0_i32 : i32
  }
  func.func @transform_3(%arg0: i32, %arg1: i32) -> (i32, i32, i32) {
    %c0_i32 = arith.constant 0 : i32
    %c0_i32_0 = arith.constant 0 : i32
    return %arg0, %c0_i32, %arg1 : i32, i32, i32
  }
}

</mosaic_0001>

<llo_original>
// kernel: tpu_custom_call.1
$region0: #{tpu_custom_call.1}
  #allocation0 [shape = 'u32[]', space=smem, size = 0x4, offset = 0x4, fixed_abs, tag = 'smem constant byte address 0x4 - core index']
  #allocation1 [shape = 'u32[144,128]{1,0:T(1,128)}', space=vmem, size = 0x12000, scoped, tag = 'internal scratch']
  %s0 = inlined_call_operand.hbm [shape: f32[2,4,256], index: 0, kind: input, shape index: {}]
  %s1 = inlined_call_operand.vmem [shape: f32[2,4], index: 1, kind: input, shape index: {}]
  %s2 = inlined_call_operand.vmem [shape: f32[2], index: 2, kind: input, shape index: {}]
  %s3 = inlined_call_operand.hbm [shape: f32[2,2,256], index: 3, kind: output, shape index: {}]
  %s4 = sld [smem:[#allocation0]]
  $region57: #{tpu_custom_call.1} parent=0
    _
  %s6 = ssub.s32 1, %s4
  %s7 = scalar_select 0, %s6, %s4
  $region1: #{tpu_custom_call.1} parent=0
    #allocation2 [shape = 'u8[8192]{0}', space=vmem, size = 0x2000, scoped, tag = 'input window, operand 0']
    #allocation3 [shape = 's32[2]{0}', space=sflag, size = 0x8, scoped, tag = 'scoped memory for tpu_custom_call.1']
    #allocation4 [shape = 's32[2]{0}', space=sflag, size = 0x8, scoped, tag = 'scoped memory for tpu_custom_call.1']
    #allocation5 [shape = 's32[2]{0}', space=sflag, size = 0x8, scoped, tag = 'scoped memory for tpu_custom_call.1']
    #allocation6 [shape = 'u8[1024]{0}', space=smem, size = 0x400, scoped, tag = 'input window, operand 1, single buffered']
    #allocation7 [shape = 'u8[512]{0}', space=smem, size = 0x200, scoped, tag = 'input window, operand 2, single buffered']
    #allocation8 [shape = 's32[1]{0}', space=sflag, size = 0x4, scoped, tag = 'scoped memory for tpu_custom_call.1']
    #allocation9 [shape = 'u8[4096]{0}', space=vmem, size = 0x1000, scoped, tag = 'output window, operand 0']
    %8 = vsyncpa [#allocation3], 0
    %s9 = scalar_lea.sflag [#allocation3], 1
    %10 = vsyncpa %s9, 0
    %11 = vsyncpa [#allocation5], 0
    %12 = vsyncpa [#allocation8], 0
    %13 = vsyncpa [#allocation4], 0
    %s14 = scalar_lea.sflag [#allocation4], 1
    %15 = vsyncpa %s14, 0
    loop: start=0, step=1, limit=4
    $region2: #{tpu_custom_call.1} parent=1 // loop_pre_header
      _
    $region3: #{tpu_custom_call.1} parent=1 // loop_header
      %s17 = sphi 0, %s21
      %p18 = scmp.ge.s32.totalorder %s17, 4
      %s24 = sphi 0, %s36
      %s25 = sphi 0, %s32
      %s26 = sphi 0, %s24
      %s27 = sphi 0, %s25
      %s28 = sphi 0, %s26
      %s29 = sphi 0, %s27
      %s41 = sphi 0, %s43
      %s44 = sphi 0, %s41
      %s45 = sphi 0, %s44
      %s61 = sphi 0, %s45
      %s65 = sphi 0, %s65
      %s67 = sphi 0, %s65
      %s68 = sphi 0, %s67
      %s82 = sphi 0, %s68
      %s86 = sphi 0, %s86
      %s88 = sphi 0, %s86
      %s89 = sphi 0, %s88
      %s103 = sphi 0, %s89
      %s111 = sphi 0, %s113
      %s114 = sphi 0, %s111
      %s115 = sphi 0, %s114
      %s131 = sphi 0, %s115
    $region4: #{tpu_custom_call.1} parent=1 // loop_header_branch
      %20 = sbr.rel (%p18) target = $region8
    $region5: #{tpu_custom_call.1} parent=1 // loop_body
      %s22 = ssub.s32 %s17, 1
      %s23 = ssub.s32 %s17, 2
      %s30 = sadd.s32 1, %s25
      %p31 = scmp.ge.s32.totalorder %s30, 1
      %s32 = scalar_select %p31, 0, %s30
      %s33 = sadd.s32 1, %s24
      %s34 = scalar_select %p31, %s33, %s24
      %p35 = scmp.ge.s32.totalorder %s34, 2
      %s36 = scalar_select %p35, 0, %s34
      %s37 = ssub.s32 %s24, %s36
      %s38 = ssub.s32 %s25, %s32
      %s39 = sor.u32 %s37, %s38
      %p40 = scmp.eq.s32.totalorder %s39, 0
      %s42 = sadd.s32 %s41, 1
      %s43 = scalar_select %p40, %s41, %s42
      %p46 = pneg %p40
      %p47 = scmp.eq.s32.totalorder %s17, 1
      %p48 = por %p46, %p47
      %p49 = scmp.ne.s32.totalorder %s41, %s44
      %p50 = scmp.eq.s32.totalorder %s17, 0
      %p51 = por %p49, %p50
      %p52 = scmp.ne.s32.totalorder %s41, %s44
      %p53 = scmp.eq.s32.totalorder %s22, 1
      %p54 = por %p52, %p53
      %p55 = scmp.ne.s32.totalorder %s44, %s45
      %p56 = scmp.eq.s32.totalorder %s22, 0
      %p57 = por %p55, %p56
      %p58 = scmp.ne.s32.totalorder %s44, %s45
      %p59 = scmp.eq.s32.totalorder %s23, 1
      %p60 = por %p58, %p59
      %p62 = scmp.ne.s32.totalorder %s45, %s61
      %p63 = scmp.eq.s32.totalorder %s23, 0
      %p64 = por %p62, %p63
      %s66 = sadd.s32 %s65, 1
      %p69 = scmp.eq.s32.totalorder %s17, 1
      %p70 = scmp.ne.s32.totalorder %s65, %s67
      %p71 = scmp.eq.s32.totalorder %s17, 0
      %p72 = por %p70, %p71
      %p73 = scmp.ne.s32.totalorder %s65, %s67
      %p74 = scmp.eq.s32.totalorder %s22, 1
      %p75 = por %p73, %p74
      %p76 = scmp.ne.s32.totalorder %s67, %s68
      %p77 = scmp.eq.s32.totalorder %s22, 0
      %p78 = por %p76, %p77
      %p79 = scmp.ne.s32.totalorder %s67, %s68
      %p80 = scmp.eq.s32.totalorder %s23, 1
      %p81 = por %p79, %p80
      %p83 = scmp.ne.s32.totalorder %s68, %s82
      %p84 = scmp.eq.s32.totalorder %s23, 0
      %p85 = por %p83, %p84
      %s87 = sadd.s32 %s86, 1
      %p90 = scmp.eq.s32.totalorder %s17, 1
      %p91 = scmp.ne.s32.totalorder %s86, %s88
      %p92 = scmp.eq.s32.totalorder %s17, 0
      %p93 = por %p91, %p92
      %p94 = scmp.ne.s32.totalorder %s86, %s88
      %p95 = scmp.eq.s32.totalorder %s22, 1
      %p96 = por %p94, %p95
      %p97 = scmp.ne.s32.totalorder %s88, %s89
      %p98 = scmp.eq.s32.totalorder %s22, 0
      %p99 = por %p97, %p98
      %p100 = scmp.ne.s32.totalorder %s88, %s89
      %p101 = scmp.eq.s32.totalorder %s23, 1
      %p102 = por %p100, %p101
      %p104 = scmp.ne.s32.totalorder %s89, %s103
      %p105 = scmp.eq.s32.totalorder %s23, 0
      %p106 = por %p104, %p105
      %s107 = ssub.s32 %s24, %s36
      %s108 = ssub.s32 %s25, %s32
      %s109 = sor.u32 %s107, %s108
      %p110 = scmp.eq.s32.totalorder %s109, 0
      %s112 = sadd.s32 %s111, 1
      %s113 = scalar_select %p110, %s111, %s112
      %p116 = pneg %p110
      %p117 = scmp.eq.s32.totalorder %s17, 1
      %p118 = por %p116, %p117
      %p119 = scmp.ne.s32.totalorder %s111, %s114
      %p120 = scmp.eq.s32.totalorder %s17, 0
      %p121 = por %p119, %p120
      %p122 = scmp.ne.s32.totalorder %s111, %s114
      %p123 = scmp.eq.s32.totalorder %s22, 1
      %p124 = por %p122, %p123
      %p125 = scmp.ne.s32.totalorder %s114, %s115
      %p126 = scmp.eq.s32.totalorder %s22, 0
      %p127 = por %p125, %p126
      %p128 = scmp.ne.s32.totalorder %s114, %s115
      %p129 = scmp.eq.s32.totalorder %s23, 1
      %p130 = por %p128, %p129
      %p132 = scmp.ne.s32.totalorder %s115, %s131
      %p133 = scmp.eq.s32.totalorder %s23, 0
      %p134 = por %p132, %p133
      %p135 = scmp.le.s32.totalorder 1, %s17
      %p136 = scmp.lt.s32.totalorder %s17, 3
      %p137 = pnand %p135, %p136
      %p138 = pneg %p137
      // Predicated region
      $region9: #{tpu_custom_call.1} parent=5 // pred_check
        _
      $region10: #{tpu_custom_call.1} parent=5 // pred_check_branch
        %140 = sbr.rel (%p137) target = $region12
      $region11: #{tpu_custom_call.1} parent=5 // pred_region
        %s141 = ssub.s32 %s17, 1
        // Predicated region
        $region13: #{tpu_custom_call.1} parent=11 // pred_check
          %p142 = pneg %p78
        $region14: #{tpu_custom_call.1} parent=11 // pred_check_branch
          %144 = sbr.rel (%p142) target = $region16
        $region15: #{tpu_custom_call.1} parent=11 // pred_region
          %s146 = ssub.s32 32, 32
          %147 = vsyncadd [#allocation5], %s146
          %s149 = sshll.u32 %s1, 4
          %s150 = int_to_ptr.vmem [resolvable:$true] %s149
          %152 = dma.vmem_to_smem %s150, 32, [#allocation6], [#allocation5]
        $region16: #{tpu_custom_call.1} parent=11 // pred_fallthru
          _
        // Predicated region
        $region17: #{tpu_custom_call.1} parent=11 // pred_check
          %p153 = pneg %p99
        $region18: #{tpu_custom_call.1} parent=11 // pred_check_branch
          %155 = sbr.rel (%p153) target = $region20
        $region19: #{tpu_custom_call.1} parent=11 // pred_region
          %s157 = ssub.s32 16, 16
          %158 = vsyncadd [#allocation8], %s157
          %s160 = sshll.u32 %s2, 4
          %s161 = int_to_ptr.vmem [resolvable:$true] %s160
          %163 = dma.vmem_to_smem %s161, 16, [#allocation7], [#allocation8]
        $region20: #{tpu_custom_call.1} parent=11 // pred_fallthru
          _
      $region12: #{tpu_custom_call.1} parent=5 // pred_fallthru
        _
      %p164 = scmp.lt.s32.totalorder %s17, 2
      // Predicated region
      $region21: #{tpu_custom_call.1} parent=5 // pred_check
        %p165 = pneg %p164
      $region22: #{tpu_custom_call.1} parent=5 // pred_check_branch
        %167 = sbr.rel (%p165) target = $region24
      $region23: #{tpu_custom_call.1} parent=5 // pred_region
        // Predicated region
        $region25: #{tpu_custom_call.1} parent=23 // pred_check
          %p168 = pneg %p51
        $region26: #{tpu_custom_call.1} parent=23 // pred_check_branch
          %170 = sbr.rel (%p168) target = $region28
        $region27: #{tpu_custom_call.1} parent=23 // pred_region
          %s171 = sand.u32 %s41, 1
          %s172 = scalar_lea.sflag [#allocation3], %s171
          %s173 = sand.u32 %s41, 1
          %s174 = smul.addr %s173, 8
          %s175 = scalar_lea.vmem [#allocation2], %s174
          %s176 = smul.u32 2, %s25
          %s178 = ssub.s32 128, 128
          %179 = vsyncadd %s172, %s178
          %s180 = smul.addr %s24, 2
          %s181 = sadd.s32 %s176, %s180
          %s182 = smul.addr %s181, 64
          %s183 = scalar_lea.hbm %s0, %s182
          %s185 = sshll.u32 %s175, 4
          %s186 = int_to_ptr.vmem [resolvable:$true] %s185
          %188 = dma.hbm_to_vmem [thread:$0]  %s183, 128, %s186, %s172
        $region28: #{tpu_custom_call.1} parent=23 // pred_fallthru
          _
      $region24: #{tpu_custom_call.1} parent=5 // pred_fallthru
        _
      %p189 = scmp.le.s32.totalorder 1, %s17
      %p190 = scmp.lt.s32.totalorder %s17, 3
      %p191 = pnand %p189, %p190
      %p192 = pneg %p191
      // Predicated region
      $region29: #{tpu_custom_call.1} parent=5 // pred_check
        _
      $region30: #{tpu_custom_call.1} parent=5 // pred_check_branch
        %194 = sbr.rel (%p191) target = $region32
      $region31: #{tpu_custom_call.1} parent=5 // pred_region
        %s195 = ssub.s32 %s17, 1
        %s196 = sand.u32 %s44, 1
        %s197 = scalar_lea.sflag [#allocation3], %s196
        %s198 = sand.u32 %s44, 1
        %s199 = smul.addr %s198, 8
        %s200 = scalar_lea.vmem [#allocation2], %s199
        // Predicated region
        $region33: #{tpu_custom_call.1} parent=31 // pred_check
          %p201 = pneg %p57
        $region34: #{tpu_custom_call.1} parent=31 // pred_check_branch
          %203 = sbr.rel (%p201) target = $region36
        $region35: #{tpu_custom_call.1} parent=31 // pred_region
          %204 = dma.done %s197, 128
        $region36: #{tpu_custom_call.1} parent=31 // pred_fallthru
          _
        // Predicated region
        $region37: #{tpu_custom_call.1} parent=31 // pred_check
          %p205 = pneg %p78
        $region38: #{tpu_custom_call.1} parent=31 // pred_check_branch
          %207 = sbr.rel (%p205) target = $region40
        $region39: #{tpu_custom_call.1} parent=31 // pred_region
          %208 = dma.done [#allocation5], 32
        $region40: #{tpu_custom_call.1} parent=31 // pred_fallthru
          _
        // Predicated region
        $region41: #{tpu_custom_call.1} parent=31 // pred_check
          %p209 = pneg %p99
        $region42: #{tpu_custom_call.1} parent=31 // pred_check_branch
          %211 = sbr.rel (%p209) target = $region44
        $region43: #{tpu_custom_call.1} parent=31 // pred_region
          %212 = dma.done [#allocation8], 16
        $region44: #{tpu_custom_call.1} parent=31 // pred_fallthru
          _
        %213 = sfence
        %s214 = sand.u32 %s44, 1
        %s215 = scalar_lea.sflag [#allocation3], %s214
        %s216 = sand.u32 %s44, 1
        %s217 = smul.addr %s216, 8
        %s218 = scalar_lea.vmem [#allocation2], %s217
        %p219 = pneg %p57
        %p220 = pneg %p54
        %p221 = pneg %p78
        %p222 = pneg %p75
        %p223 = pneg %p99
        %p224 = pneg %p96
        %p225 = pneg %p127
        %p226 = pneg %p124
        %s227 = sand.u32 %s114, 1
        %s228 = scalar_lea.sflag [#allocation4], %s227
        %s229 = sand.u32 %s114, 1
        %s230 = smul.addr %s229, 4
        %s231 = scalar_lea.vmem [#allocation9], %s230
        %s232 = smul.u32 2, %s27
        %s233 = smul.u32 2, %s27
        %v234 = vld [vmem:[%s200] sm:$0xff]
        %s235 = sld [smem:[#allocation6]]
        %v236 = vstv %s235
        %v237 = vmul.f32 %v234, %v236
        %s238 = sld [smem:[#allocation6 + $0x1]]
        %v239 = vstv %s238
        %v240 = vmul.f32 %v234, %v239
        %v242 = vrot.slane %v240, 5
        %v243 = vrot.slane %v242, 4
        %v245 = vadd.f32 %v237, %v243
        %s246 = sld [smem:[#allocation6 + $0x2]]
        %v247 = vstv %s246
        %v248 = vmul.f32 %v234, %v247
        %v250 = vrot.slane %v248, 6
        %v251 = vrot.slane %v250, 4
        %v253 = vadd.f32 %v245, %v251
        %s254 = sld [smem:[#allocation6 + $0x3]]
        %v255 = vstv %s254
        %v256 = vmul.f32 %v234, %v255
        %v258 = vrot.slane %v256, 7
        %v259 = vrot.slane %v258, 4
        %v261 = vadd.f32 %v253, %v259
        %s262 = sld [smem:[#allocation7]]
        %v263 = vstv %s262
        %v264 = vadd.f32 %v261, %v263
        %s265 = sld [smem:[#allocation6 + $0x80]]
        %v266 = vstv %s265
        %v267 = vmul.f32 %v234, %v266
        %s268 = sld [smem:[#allocation6 + $0x81]]
        %v269 = vstv %s268
        %v270 = vmul.f32 %v234, %v269
        %v272 = vrot.slane %v270, 5
        %v273 = vrot.slane %v272, 4
        %v275 = vadd.f32 %v267, %v273
        %s276 = sld [smem:[#allocation6 + $0x82]]
        %v277 = vstv %s276
        %v278 = vmul.f32 %v234, %v277
        %v280 = vrot.slane %v278, 6
        %v281 = vrot.slane %v280, 4
        %v283 = vadd.f32 %v275, %v281
        %s284 = sld [smem:[#allocation6 + $0x83]]
        %v285 = vstv %s284
        %v286 = vmul.f32 %v234, %v285
        %v288 = vrot.slane %v286, 7
        %v289 = vrot.slane %v288, 4
        %v291 = vadd.f32 %v283, %v289
        %s292 = sld [smem:[#allocation7 + $0x1]]
        %v293 = vstv %s292
        %v294 = vadd.f32 %v291, %v293
        %v296 = vlaneseq
        %v297 = vshrl.u32 %v296, 7
        %v298 = vsub.s32 0, %v297
        %v299 = vrot.slane %v264, %v298
        %v300 = vlaneseq
        %v301 = vshrl.u32 %v300, 7
        %v302 = vsub.s32 4, %v301
        %v303 = vrot.slane %v264, %v302
        %v307 = vlaneseq
        %v308 = vshrl.u32 %v307, 7
        %v309 = vsub.s32 0, %v308
        %v310 = vrot.slane %v294, %v309
        %v311 = vlaneseq
        %v312 = vshrl.u32 %v311, 7
        %v313 = vsub.s32 4, %v312
        %v314 = vrot.slane %v294, %v313
        %vm317 = vcmask 1040384
        %v318 = vsel %vm317, %v299, %v310
        %v319 = vsel %vm317, %v303, %v314
        %v322 = vcombine.low %v318, %v319
        %v324 = vunpack.c.l.s4 1983009808
        %v325 = vunpack.c.0.s8 %v324
        %v326 = vlaneseq
        %v327 = vshrl.u32 %v326, 7
        %v328 = vsub.s32 %v325, %v327
        %v329 = vrot.slane %v322, %v328
        %331 = vst [vmem:[%s231] sm:$0xf] %v329
        %s332 = sand.u32 %s114, 1
        %s333 = scalar_lea.sflag [#allocation4], %s332
        %s334 = sand.u32 %s114, 1
        %s335 = smul.addr %s334, 4
        %s336 = scalar_lea.vmem [#allocation9], %s335
        // Predicated region
        $region45: #{tpu_custom_call.1} parent=31 // pred_check
          %p337 = pneg %p124
        $region46: #{tpu_custom_call.1} parent=31 // pred_check_branch
          %339 = sbr.rel (%p337) target = $region48
        $region47: #{tpu_custom_call.1} parent=31 // pred_region
          %s340 = smul.u32 2, %s27
          %s342 = ssub.s32 64, 64
          %343 = vsyncadd %s333, %s342
          %s344 = smul.addr %s26, 2
          %s345 = sadd.s32 %s340, %s344
          %s346 = smul.addr %s345, 32
          %s347 = scalar_lea.hbm %s3, %s346
          %s349 = sshll.u32 %s336, 4
          %s350 = int_to_ptr.vmem [resolvable:$true] %s349
          %352 = dma.vmem_to_hbm [thread:$0]  %s350, 64, %s347, %s333
        $region48: #{tpu_custom_call.1} parent=31 // pred_fallthru
          _
      $region32: #{tpu_custom_call.1} parent=5 // pred_fallthru
        _
      %p353 = scmp.le.s32.totalorder 2, %s17
      // Predicated region
      $region49: #{tpu_custom_call.1} parent=5 // pred_check
        %p354 = pneg %p353
      $region50: #{tpu_custom_call.1} parent=5 // pred_check_branch
        %356 = sbr.rel (%p354) target = $region52
      $region51: #{tpu_custom_call.1} parent=5 // pred_region
        %s357 = ssub.s32 %s17, 2
        // Predicated region
        $region53: #{tpu_custom_call.1} parent=51 // pred_check
          %p358 = pneg %p130
        $region54: #{tpu_custom_call.1} parent=51 // pred_check_branch
          %360 = sbr.rel (%p358) target = $region56
        $region55: #{tpu_custom_call.1} parent=51 // pred_region
          %s361 = sand.u32 %s115, 1
          %s362 = scalar_lea.sflag [#allocation4], %s361
          %s363 = sand.u32 %s115, 1
          %s364 = smul.addr %s363, 4
          %s365 = scalar_lea.vmem [#allocation9], %s364
          %366 = dma.done %s362, 64
        $region56: #{tpu_custom_call.1} parent=51 // pred_fallthru
          _
      $region52: #{tpu_custom_call.1} parent=5 // pred_fallthru
        _
    $region6: #{tpu_custom_call.1} parent=1 // loop_footer
      %s21 = sadd.s32 1, %s17
    $region7: #{tpu_custom_call.1} parent=1 // loop_footer_branch
      %16 = sbr.rel target = $region3
    $region8: #{tpu_custom_call.1} parent=1 // loop_exit
      _
    %367 = vsyncpa [#allocation3], 1
    %s368 = scalar_lea.sflag [#allocation3], 1
    %369 = vsyncpa %s368, 1
    %370 = vsyncpa [#allocation4], 1
    %s371 = scalar_lea.sflag [#allocation4], 1
    %372 = vsyncpa %s371, 1
    %373 = vsyncpa [#allocation5], 1
    %s374 = scalar_lea.sflag [#allocation5], 1
    %375 = vsyncpa %s374, 1
    %376 = vsyncpa [#allocation8], 1

</llo_original>
